<compile_context>
chip_gen: v6e
topology: v6e:2x2x1
jax: 0.10.0
libtpu: 0.0.40
codegen_flags: <defaults>
</compile_context>

<pallas_src>
import functools

import jax
import jax.numpy as jnp
from jax.experimental import pallas as pl
from jax.experimental.pallas import tpu as pltpu

LANE = 128  # vreg lane width; node axis and feature axes are zero-padded to this.
            # (If hidden_dim > 128, 128-granularity padding already yields >= 256 lanes,
            #  filling the 256-wide MXU on v6e/v7x; for hidden_dim <= 128 we accept 128.)


def _round_up(v, m):
    return (v + m - 1) // m * m


def _pad2(x, rows, cols, dtype=None):
    r, c = x.shape
    y = jnp.pad(x, ((0, rows - r), (0, cols - c)))
    return y.astype(dtype) if dtype is not None else y


# ----------------------------- fused Pallas kernel ------------------------------ #

def _fused_gnn_kernel(h0_ref, a_ref, w_ref, bgb_ref, w_out_ref, b_out_ref,
                      o_ref, h_ref, *, eps, skip, feat_valid):
    """Grid axis = layer index. h_ref is a persistent f32 VMEM scratch carrying the state."""
    layer = pl.program_id(0)
    last = pl.num_programs(0) - 1

    # ---- layer 0: load the precomputed linear_in result into the persistent state ----
    @pl.when(layer == 0)
    def _():
        h_ref[...] = h0_ref[...]

    h = h_ref[...]                                            # f32 [Np, Hp]

    # ---- GCNConv: A_norm @ (h @ W) + b   (bf16 MXU matmuls, f32 accumulation) ----
    hw = jnp.dot(h.astype(jnp.bfloat16), w_ref[0],
                 preferred_element_type=jnp.float32)
    bgb = bgb_ref[0]                                          # (8, Hp): rows 0=b, 1=gamma, 2=beta
    agg = jnp.dot(a_ref[...], hw.astype(jnp.bfloat16),
                  preferred_element_type=jnp.float32) + bgb[0:1]

    # ---- maskless LayerNorm: padded lanes of agg are exactly 0, gamma/beta padded to 0 ----
    inv_f = 1.0 / float(feat_valid)
    mean = jnp.sum(agg, axis=-1, keepdims=True) * inv_f
    ex2 = jnp.sum(agg * agg, axis=-1, keepdims=True) * inv_f
    var = jnp.maximum(ex2 - mean * mean, 0.0)
    normed = (agg - mean) * jax.lax.rsqrt(var + eps) * bgb[1:2] + bgb[2:3]

    # ---- ReLU (+ identity dropout) + skip connection ----
    act = jnp.maximum(normed, 0.0)
    h_new = act + h if skip else act
    h_ref[...] = h_new

    # ---- last layer: linear_out (output block resident across the whole grid) ----
    @pl.when(layer == last)
    def _():
        o_ref[...] = (
            jnp.dot(h_new.astype(jnp.bfloat16), w_out_ref[...],
                    preferred_element_type=jnp.float32)
            + b_out_ref[0:1]
        )


# ------------------------------ JAX glue ----------------------------------- #

def normalized_adjacency(edge_index, num_nodes):
    """Dense GCN-normalized adjacency matching PyG gcn_norm (edge_weight=None):
    duplicate edges accumulate; existing self-loops are dropped and replaced by a
    single weight-1 self-loop per node; then D^-1/2 (A+I) D^-1/2."""
    src, dst = edge_index[0], edge_index[1]
    w = (src != dst).astype(jnp.float32)            # drop pre-existing self-loops
    a = jnp.zeros((num_nodes, num_nodes), jnp.float32)
    a = a.at[dst, src].add(w)                       # multi-edges sum (row = destination)
    idx = jnp.arange(num_nodes)
    a = a.at[idx, idx].add(1.0)                     # one fresh self-loop of weight 1
    deg = jnp.sum(a, axis=1)
    dinv = jnp.where(deg > 0, jax.lax.rsqrt(deg), 0.0)
    return a * dinv[:, None] * dinv[None, :]


def gnn_forward(params, x, edge_index, *, skip=True, eps=1e-5):
    n, _ = x.shape
    hd = params["w_in"].shape[1]
    out_dim = params["w_out"].shape[1]
    num_layers = len(params["layers"])
    assert num_layers >= 1

    # Lane-dense padded sizes (zero padding; sliced off at the end).
    np_ = _round_up(n, LANE)
    hp = _round_up(hd, LANE)
    op = _round_up(out_dim, LANE)

    # linear_in hoisted out of the kernel (f32 XLA matmul, read exactly once).
    h0 = x @ params["w_in"] + params["b_in"][None, :]          # (N, hd) f32
    h0_p = _pad2(h0, np_, hp)                                  # padded rows/lanes exactly 0

    a_p = _pad2(normalized_adjacency(edge_index, n), np_, np_, jnp.bfloat16)
    w_out_p = _pad2(params["w_out"], hp, op, jnp.bfloat16)
    b_out_p = _pad2(params["b_out"].reshape(1, out_dim), 8, op)  # row 0 = bias, rest 0

    # Per-layer MXU weights (bf16) and a packed (8, hp) [b; gamma; beta; 0...] slab per layer.
    w_l = jnp.stack([_pad2(lp["w"], hp, hp, jnp.bfloat16) for lp in params["layers"]])
    bgb_l = jnp.stack([
        jnp.zeros((8, hp), jnp.float32)
        .at[0, :hd].set(lp["b"])
        .at[1, :hd].set(lp["gamma"])
        .at[2, :hd].set(lp["beta"])
        for lp in params["layers"]
    ])

    kernel = functools.partial(_fused_gnn_kernel, eps=eps, skip=skip, feat_valid=hd)

    def resident(shape):
        # Constant block index across the grid -> single-buffer (double-buffering a block
        # whose index never changes just doubles its VMEM footprint).
        return pl.BlockSpec(shape, lambda l: (0, 0), pipeline_mode=pl.Buffered(1))

    # Explicit VMEM budget (bytes), computed from the padded shapes and buffer counts.
    f32b, bf16b = 4, 2
    vmem_bytes = (
        np_ * hp * f32b          # h0                (resident, 1 buffer)
        + np_ * np_ * bf16b      # A_norm            (resident, 1 buffer)
        + 2 * hp * hp * bf16b    # per-layer W       (streamed, 2 buffers)
        + 2 * 8 * hp * f32b      # per-layer b/g/b   (streamed, 2 buffers)
        + hp * op * bf16b        # w_out             (resident, 1 buffer)
        + 8 * op * f32b          # b_out             (resident, 1 buffer)
        + np_ * op * f32b        # output            (resident, 1 buffer)
        + np_ * hp * f32b        # persistent h scratch
    )
    vmem_limit = int(min(vmem_bytes + (4 << 20), 128 << 20))

    out_p = pl.pallas_call(
        kernel,
        out_shape=jax.ShapeDtypeStruct((np_, op), jnp.float32),
        grid_spec=pltpu.PrefetchScalarGridSpec(
            num_scalar_prefetch=0,
            grid=(num_layers,),
            in_specs=[
                resident((np_, hp)),                              # h0 (layer 0 only)
                resident((np_, np_)),                             # A_norm (loaded once)
                pl.BlockSpec((1, hp, hp), lambda l: (l, 0, 0)),   # per-layer W
                pl.BlockSpec((1, 8, hp), lambda l: (l, 0, 0)),    # per-layer [b;gamma;beta]
                resident((hp, op)),                               # w_out
                resident((8, op)),                                # b_out
            ],
            out_specs=resident((np_, op)),
            scratch_shapes=[pltpu.VMEM((np_, hp), jnp.float32)],  # persistent h state
        ),
        compiler_params=pltpu.CompilerParams(
            dimension_semantics=("arbitrary",),   # layers are sequential (h carries over)
            vmem_limit_bytes=vmem_limit,
        ),
    )(h0_p, a_p, w_l, bgb_l, w_out_p, b_out_p)

    return out_p[:n, :out_dim]


def init_params(key, in_dim, hidden_dim, out_dim, num_layers):
    keys = jax.random.split(key, 2 + num_layers)
    params = {}
    params["w_in"] = jax.random.normal(keys[0], (in_dim, hidden_dim), jnp.float32) * 0.1
    params["b_in"] = jnp.zeros((hidden_dim,), jnp.float32)
    params["layers"] = []
    for li in range(num_layers):
        lk = keys[2 + li]
        params["layers"].append({
            "w": jax.random.normal(lk, (hidden_dim, hidden_dim), jnp.float32) * 0.1,
            "b": jnp.zeros((hidden_dim,), jnp.float32),
            "gamma": jnp.ones((hidden_dim,), jnp.float32),    # LayerNorm default init
            "beta": jnp.zeros((hidden_dim,), jnp.float32),
        })
    params["w_out"] = jax.random.normal(keys[1], (hidden_dim, out_dim), jnp.float32) * 0.1
    params["b_out"] = jnp.zeros((out_dim,), jnp.float32)
    return params


# ------------------------------ driver ------------------------------------- #

if __name__ == "__main__":
    # GNNConfig(layer_type='gcn', in_dim=16, num_layers=2, hidden_dim=32,
    #           out_dim=16, num_heads=1, activation='relu', norm='layernorm',
    #           dropout=0.0, skip=True)
    N, E = 64, 256
    IN_DIM, HIDDEN, OUT_DIM, NUM_LAYERS = 16, 32, 16, 2

    key = jax.random.PRNGKey(0)
    kx, ke, kp = jax.random.split(key, 3)

    x = jax.random.normal(kx, (N, IN_DIM), jnp.float32)
    edge_index = jax.random.randint(ke, (2, E), 0, N, dtype=jnp.int32)

    params = init_params(kp, IN_DIM, HIDDEN, OUT_DIM, NUM_LAYERS)

    fwd = jax.jit(functools.partial(gnn_forward, skip=True))
    out = fwd(params, x, edge_index)
    out = jax.block_until_ready(out)
    assert out.shape == (N, OUT_DIM) and out.dtype == jnp.float32
    assert bool(jnp.all(jnp.isfinite(out)))
    print("KERNEL_OK")
</pallas_src>

<mosaic_0001>
module attributes {stable_mosaic.version = 11 : i64} {
  func.func private @main(%arg0: i32) attributes {dimension_semantics = [#tpu.dimension_semantics<core_parallel>], iteration_bounds = array<i64: 2>, tpu.core_type = #tpu.core_type<sc_scalar_subcore>, window_params = []} {
    return
  }
}

module attributes {stable_mosaic.version = 11 : i64} {
  func.func private @main(%arg0: i32) attributes {dimension_semantics = [#tpu.dimension_semantics<core_parallel>], iteration_bounds = array<i64: 2>, tpu.core_type = #tpu.core_type<sc_scalar_subcore>, window_params = []} {
    return
  }
}

module attributes {stable_mosaic.version = 11 : i64} {
  func.func @_fused_gnn_kernel(%arg0: i32, %arg1: memref<128x128xf32, #tpu.memory_space<vmem>>, %arg2: memref<128x128xbf16, #tpu.memory_space<vmem>>, %arg3: memref<1x128x128xbf16, #tpu.memory_space<vmem>>, %arg4: memref<1x8x128xf32, #tpu.memory_space<vmem>>, %arg5: memref<128x128xbf16, #tpu.memory_space<vmem>>, %arg6: memref<8x128xf32, #tpu.memory_space<vmem>>, %arg7: memref<128x128xf32, #tpu.memory_space<vmem>>, %arg8: memref<128x128xf32, #tpu.memory_space<vmem>>) attributes {dimension_semantics = [#tpu.dimension_semantics<arbitrary>], iteration_bounds = array<i64: 2>, scalar_prefetch = 0 : i64, scratch_operands = 1 : i64, tpu.core_type = #tpu.core_type<tc>, window_params = [{pipeline_mode = #tpu.pipeline_mode<synchronous>, transform_indices = @transform_0, window_bounds = array<i64: 128, 128>}, {pipeline_mode = #tpu.pipeline_mode<synchronous>, transform_indices = @transform_1, window_bounds = array<i64: 128, 128>}, {transform_indices = @transform_2, window_bounds = array<i64: 1, 128, 128>}, {transform_indices = @transform_3, window_bounds = array<i64: 1, 8, 128>}, {pipeline_mode = #tpu.pipeline_mode<synchronous>, transform_indices = @transform_4, window_bounds = array<i64: 128, 128>}, {pipeline_mode = #tpu.pipeline_mode<synchronous>, transform_indices = @transform_5, window_bounds = array<i64: 8, 128>}, {pipeline_mode = #tpu.pipeline_mode<synchronous>, transform_indices = @transform_6, window_bounds = array<i64: 128, 128>}]} {
    %c0_i32 = arith.constant 0 : i32
    %0 = arith.cmpi eq, %arg0, %c0_i32 : i32
    %1 = arith.extui %0 : i1 to i32
    %c0_i32_0 = arith.constant 0 : i32
    %2 = arith.cmpi ne, %1, %c0_i32_0 : i32
    scf.if %2 {
      %c0_21 = arith.constant 0 : index
      %c0_22 = arith.constant 0 : index
      %49 = vector.load %arg1[%c0_21, %c0_22] : memref<128x128xf32, #tpu.memory_space<vmem>>, vector<128x128xf32>
      %c0_23 = arith.constant 0 : index
      %c0_24 = arith.constant 0 : index
      %50 = vector.load %arg8[%c0_23, %c0_24] : memref<128x128xf32, #tpu.memory_space<vmem>>, vector<128x128xf32>
      tpu.vector_store %arg8[%c0_23, %c0_24], %49 {strides = array<i32>} : memref<128x128xf32, #tpu.memory_space<vmem>>, vector<128x128xf32>,
    } else {
    }
    %c0 = arith.constant 0 : index
    %c0_1 = arith.constant 0 : index
    %3 = vector.load %arg8[%c0, %c0_1] : memref<128x128xf32, #tpu.memory_space<vmem>>, vector<128x128xf32>
    %4 = arith.truncf %3 : vector<128x128xf32> to vector<128x128xbf16>
    %c0_2 = arith.constant 0 : index
    %c0_3 = arith.constant 0 : index
    %c0_4 = arith.constant 0 : index
    %5 = vector.load %arg3[%c0_2, %c0_3, %c0_4] : memref<1x128x128xbf16, #tpu.memory_space<vmem>>, vector<1x128x128xbf16>
    %6 = vector.shape_cast %5 : vector<1x128x128xbf16> to vector<128x128xbf16>
    %cst = arith.constant dense<0.000000e+00> : vector<128x128xf32>
    %7 = tpu.matmul %4, %6, %cst {dimension_numbers = #tpu.dot_dimension_numbers<[1], [0], [0], [1], [0, 0, 1, 1], [], []>} : vector<128x128xbf16>, vector<128x128xbf16>, vector<128x128xf32> -> vector<128x128xf32>
    %c0_5 = arith.constant 0 : index
    %c0_6 = arith.constant 0 : index
    %c0_7 = arith.constant 0 : index
    %8 = vector.load %arg4[%c0_5, %c0_6, %c0_7] : memref<1x8x128xf32, #tpu.memory_space<vmem>>, vector<1x8x128xf32>
    %9 = vector.shape_cast %8 : vector<1x8x128xf32> to vector<8x128xf32>
    %c0_8 = arith.constant 0 : index
    %c0_9 = arith.constant 0 : index
    %10 = vector.load %arg2[%c0_8, %c0_9] : memref<128x128xbf16, #tpu.memory_space<vmem>>, vector<128x128xbf16>
    %11 = arith.truncf %7 : vector<128x128xf32> to vector<128x128xbf16>
    %cst_10 = arith.constant dense<0.000000e+00> : vector<128x128xf32>
    %12 = tpu.matmul %10, %11, %cst_10 {dimension_numbers = #tpu.dot_dimension_numbers<[1], [0], [0], [1], [0, 0, 1, 1], [], []>} : vector<128x128xbf16>, vector<128x128xbf16>, vector<128x128xf32> -> vector<128x128xf32>
    %13 = vector.extract_strided_slice %9 {offsets = [0, 0], sizes = [1, 128], strides = [1, 1]} : vector<8x128xf32> to vector<1x128xf32>
    %14 = vector.broadcast %13 : vector<1x128xf32> to vector<128x128xf32>
    %15 = arith.addf %12, %14 : vector<128x128xf32>
    %cst_11 = arith.constant dense<0.000000e+00> : vector<128xf32>
    %16 = vector.multi_reduction <add>, %15, %cst_11 [1] : vector<128x128xf32> to vector<128xf32>
    %17 = vector.shape_cast %16 : vector<128xf32> to vector<128x1xf32>
    %cst_12 = arith.constant 3.125000e-02 : f32
    %18 = vector.broadcast %cst_12 : f32 to vector<128x1xf32>
    %19 = arith.mulf %17, %18 : vector<128x1xf32>
    %20 = arith.mulf %15, %15 : vector<128x128xf32>
    %cst_13 = arith.constant dense<0.000000e+00> : vector<128xf32>
    %21 = vector.multi_reduction <add>, %20, %cst_13 [1] : vector<128x128xf32> to vector<128xf32>
    %22 = vector.shape_cast %21 : vector<128xf32> to vector<128x1xf32>
    %cst_14 = arith.constant 3.125000e-02 : f32
    %23 = vector.broadcast %cst_14 : f32 to vector<128x1xf32>
    %24 = arith.mulf %22, %23 : vector<128x1xf32>
    %25 = arith.mulf %19, %19 : vector<128x1xf32>
    %26 = arith.subf %24, %25 : vector<128x1xf32>
    %cst_15 = arith.constant 0.000000e+00 : f32
    %27 = vector.broadcast %cst_15 : f32 to vector<128x1xf32>
    %28 = arith.maximumf %26, %27 : vector<128x1xf32>
    %29 = vector.broadcast %19 : vector<128x1xf32> to vector<128x128xf32>
    %30 = arith.subf %15, %29 : vector<128x128xf32>
    %cst_16 = arith.constant 9.99999974E-6 : f32
    %31 = vector.broadcast %cst_16 : f32 to vector<128x1xf32>
    %32 = arith.addf %28, %31 : vector<128x1xf32>
    %33 = math.rsqrt %32 : vector<128x1xf32>
    %34 = vector.broadcast %33 : vector<128x1xf32> to vector<128x128xf32>
    %35 = arith.mulf %30, %34 : vector<128x128xf32>
    %36 = vector.extract_strided_slice %9 {offsets = [1, 0], sizes = [1, 128], strides = [1, 1]} : vector<8x128xf32> to vector<1x128xf32>
    %37 = vector.broadcast %36 : vector<1x128xf32> to vector<128x128xf32>
    %38 = arith.mulf %35, %37 : vector<128x128xf32>
    %39 = vector.extract_strided_slice %9 {offsets = [2, 0], sizes = [1, 128], strides = [1, 1]} : vector<8x128xf32> to vector<1x128xf32>
    %40 = vector.broadcast %39 : vector<1x128xf32> to vector<128x128xf32>
    %41 = arith.addf %38, %40 : vector<128x128xf32>
    %cst_17 = arith.constant 0.000000e+00 : f32
    %42 = vector.broadcast %cst_17 : f32 to vector<128x128xf32>
    %43 = arith.maximumf %41, %42 : vector<128x128xf32>
    %44 = arith.addf %43, %3 : vector<128x128xf32>
    %c0_18 = arith.constant 0 : index
    %c0_19 = arith.constant 0 : index
    %45 = vector.load %arg8[%c0_18, %c0_19] : memref<128x128xf32, #tpu.memory_space<vmem>>, vector<128x128xf32>
    tpu.vector_store %arg8[%c0_18, %c0_19], %44 {strides = array<i32>} : memref<128x128xf32, #tpu.memory_space<vmem>>, vector<128x128xf32>,
    %c1_i32 = arith.constant 1 : i32
    %46 = arith.cmpi eq, %arg0, %c1_i32 : i32
    %47 = arith.extui %46 : i1 to i32
    %c0_i32_20 = arith.constant 0 : i32
    %48 = arith.cmpi ne, %47, %c0_i32_20 : i32
    scf.if %48 {
      %49 = arith.truncf %44 : vector<128x128xf32> to vector<128x128xbf16>
      %c0_21 = arith.constant 0 : index
      %c0_22 = arith.constant 0 : index
      %50 = vector.load %arg5[%c0_21, %c0_22] : memref<128x128xbf16, #tpu.memory_space<vmem>>, vector<128x128xbf16>
      %cst_23 = arith.constant dense<0.000000e+00> : vector<128x128xf32>
      %51 = tpu.matmul %49, %50, %cst_23 {dimension_numbers = #tpu.dot_dimension_numbers<[1], [0], [0], [1], [0, 0, 1, 1], [], []>} : vector<128x128xbf16>, vector<128x128xbf16>, vector<128x128xf32> -> vector<128x128xf32>
      %c0_24 = arith.constant 0 : index
      %c0_25 = arith.constant 0 : index
      %52 = vector.load %arg6[%c0_24, %c0_25] : memref<8x128xf32, #tpu.memory_space<vmem>>, vector<1x128xf32>
      %53 = vector.broadcast %52 : vector<1x128xf32> to vector<128x128xf32>
      %54 = arith.addf %51, %53 : vector<128x128xf32>
      %c0_26 = arith.constant 0 : index
      %c0_27 = arith.constant 0 : index
      %55 = vector.load %arg7[%c0_26, %c0_27] : memref<128x128xf32, #tpu.memory_space<vmem>>, vector<128x128xf32>
      tpu.vector_store %arg7[%c0_26, %c0_27], %54 {strides = array<i32>} : memref<128x128xf32, #tpu.memory_space<vmem>>, vector<128x128xf32>,
    } else {
    }
    return
  }
  func.func @transform_0(%arg0: i32) -> (i32, i32) {
    %c0_i32 = arith.constant 0 : i32
    %c0_i32_0 = arith.constant 0 : i32
    %c0_i32_1 = arith.constant 0 : i32
    return %c0_i32, %c0_i32_0 : i32, i32
  }
  func.func @transform_1(%arg0: i32) -> (i32, i32) {
    %c0_i32 = arith.constant 0 : i32
    %c0_i32_0 = arith.constant 0 : i32
    %c0_i32_1 = arith.constant 0 : i32
    return %c0_i32, %c0_i32_0 : i32, i32
  }
  func.func @transform_2(%arg0: i32) -> (i32, i32, i32) {
    %c0_i32 = arith.constant 0 : i32
    %c0_i32_0 = arith.constant 0 : i32
    %c0_i32_1 = arith.constant 0 : i32
    return %arg0, %c0_i32, %c0_i32_0 : i32, i32, i32
  }
  func.func @transform_3(%arg0: i32) -> (i32, i32, i32) {
    %c0_i32 = arith.constant 0 : i32
    %c0_i32_0 = arith.constant 0 : i32
    %c0_i32_1 = arith.constant 0 : i32
    return %arg0, %c0_i32, %c0_i32_0 : i32, i32, i32
  }
  func.func @transform_4(%arg0: i32) -> (i32, i32) {
    %c0_i32 = arith.constant 0 : i32
    %c0_i32_0 = arith.constant 0 : i32
    %c0_i32_1 = arith.constant 0 : i32
    return %c0_i32, %c0_i32_0 : i32, i32
  }
  func.func @transform_5(%arg0: i32) -> (i32, i32) {
    %c0_i32 = arith.constant 0 : i32
    %c0_i32_0 = arith.constant 0 : i32
    %c0_i32_1 = arith.constant 0 : i32
    return %c0_i32, %c0_i32_0 : i32, i32
  }
  func.func @transform_6(%arg0: i32) -> (i32, i32) {
    %c0_i32 = arith.constant 0 : i32
    %c0_i32_0 = arith.constant 0 : i32
    %c0_i32_1 = arith.constant 0 : i32
    return %c0_i32, %c0_i32_0 : i32, i32
  }
}

</mosaic_0001>

<llo_original>
// kernel: gnn_forward.1
$region0: #{gnn_forward.1}
  #allocation0 [shape = 'u32[]', space=smem, size = 0x4, offset = 0x4, fixed_abs, tag = 'smem constant byte address 0x4 - core index']
  #allocation1 [shape = 'u32[144,128]{1,0:T(1,128)}', space=vmem, size = 0x12000, scoped, tag = 'internal scratch']
  #allocation2 [shape = 'f32[128,128]{1,0:T(8,128)}', space=vmem, size = 0x10000, scoped, tag = 'scratch operand']
  %s0 = inlined_call_operand.vmem [shape: f32[128,128], index: 0, kind: input, shape index: {}]
  %s1 = inlined_call_operand.vmem [shape: bf16[128,128], index: 1, kind: input, shape index: {}]
  %s2 = inlined_call_operand.vmem [shape: bf16[2,128,128], index: 2, kind: input, shape index: {}]
  %s3 = inlined_call_operand.vmem [shape: f32[2,8,128], index: 3, kind: input, shape index: {}]
  %s4 = inlined_call_operand.vmem [shape: bf16[128,128], index: 4, kind: input, shape index: {}]
  %s5 = inlined_call_operand.vmem [shape: f32[8,128], index: 5, kind: input, shape index: {}]
  %s6 = inlined_call_operand.vmem [shape: f32[128,128], index: 6, kind: output, shape index: {}]
  %s7 = sld [smem:[#allocation0]]
  $region65: #{gnn_forward.1} parent=0
    _
  %s9 = ssub.s32 1, %s7
  %s10 = scalar_select 0, %s9, %s7
  loop: start=0, step=1, limit=4
  $region2: #{gnn_forward.1} parent=0 // loop_pre_header
    _
  $region3: #{gnn_forward.1} parent=0 // loop_header
    %s12 = sphi 0, %s16
    %p13 = scmp.ge.s32.totalorder %s12, 4
    %s20 = sphi 0, %s20
    %s22 = sphi 0, %s20
    %s23 = sphi 0, %s22
    %s37 = sphi 0, %s23
    %s41 = sphi 0, %s41
    %s43 = sphi 0, %s41
    %s44 = sphi 0, %s43
    %s58 = sphi 0, %s44
    %s64 = sphi 0, %s66
    %s67 = sphi 0, %s64
    %s68 = sphi 0, %s67
    %s84 = sphi 0, %s68
    %s90 = sphi 0, %s92
    %s93 = sphi 0, %s90
    %s94 = sphi 0, %s93
    %s110 = sphi 0, %s94
    %s114 = sphi 0, %s114
    %s116 = sphi 0, %s114
    %s117 = sphi 0, %s116
    %s131 = sphi 0, %s117
    %s135 = sphi 0, %s135
    %s137 = sphi 0, %s135
    %s138 = sphi 0, %s137
    %s152 = sphi 0, %s138
    %s156 = sphi 0, %s156
    %s158 = sphi 0, %s156
    %s159 = sphi 0, %s158
    %s173 = sphi 0, %s159
  $region4: #{gnn_forward.1} parent=0 // loop_header_branch
    %15 = sbr.rel (%p13) target = $region8
  $region5: #{gnn_forward.1} parent=0 // loop_body
    %s17 = ssub.s32 %s12, 1
    %s18 = ssub.s32 %s12, 2
    %s19 = sadd.s32 %s12, 1
    %s21 = sadd.s32 %s20, 1
    %p24 = scmp.eq.s32.totalorder %s12, 1
    %p25 = scmp.ne.s32.totalorder %s20, %s22
    %p26 = scmp.eq.s32.totalorder %s12, 0
    %p27 = por %p25, %p26
    %p28 = scmp.ne.s32.totalorder %s20, %s22
    %p29 = scmp.eq.s32.totalorder %s17, 1
    %p30 = por %p28, %p29
    %p31 = scmp.ne.s32.totalorder %s22, %s23
    %p32 = scmp.eq.s32.totalorder %s17, 0
    %p33 = por %p31, %p32
    %p34 = scmp.ne.s32.totalorder %s22, %s23
    %p35 = scmp.eq.s32.totalorder %s18, 1
    %p36 = por %p34, %p35
    %p38 = scmp.ne.s32.totalorder %s23, %s37
    %p39 = scmp.eq.s32.totalorder %s18, 0
    %p40 = por %p38, %p39
    %s42 = sadd.s32 %s41, 1
    %p45 = scmp.eq.s32.totalorder %s12, 1
    %p46 = scmp.ne.s32.totalorder %s41, %s43
    %p47 = scmp.eq.s32.totalorder %s12, 0
    %p48 = por %p46, %p47
    %p49 = scmp.ne.s32.totalorder %s41, %s43
    %p50 = scmp.eq.s32.totalorder %s17, 1
    %p51 = por %p49, %p50
    %p52 = scmp.ne.s32.totalorder %s43, %s44
    %p53 = scmp.eq.s32.totalorder %s17, 0
    %p54 = por %p52, %p53
    %p55 = scmp.ne.s32.totalorder %s43, %s44
    %p56 = scmp.eq.s32.totalorder %s18, 1
    %p57 = por %p55, %p56
    %p59 = scmp.ne.s32.totalorder %s44, %s58
    %p60 = scmp.eq.s32.totalorder %s18, 0
    %p61 = por %p59, %p60
    %s62 = ssub.s32 %s12, %s19
    %p63 = scmp.eq.s32.totalorder %s62, 0
    %s65 = sadd.s32 %s64, 1
    %s66 = scalar_select %p63, %s64, %s65
    %p69 = pneg %p63
    %p70 = scmp.eq.s32.totalorder %s12, 1
    %p71 = por %p69, %p70
    %p72 = scmp.ne.s32.totalorder %s64, %s67
    %p73 = scmp.eq.s32.totalorder %s12, 0
    %p74 = por %p72, %p73
    %p75 = scmp.ne.s32.totalorder %s64, %s67
    %p76 = scmp.eq.s32.totalorder %s17, 1
    %p77 = por %p75, %p76
    %p78 = scmp.ne.s32.totalorder %s67, %s68
    %p79 = scmp.eq.s32.totalorder %s17, 0
    %p80 = por %p78, %p79
    %p81 = scmp.ne.s32.totalorder %s67, %s68
    %p82 = scmp.eq.s32.totalorder %s18, 1
    %p83 = por %p81, %p82
    %p85 = scmp.ne.s32.totalorder %s68, %s84
    %p86 = scmp.eq.s32.totalorder %s18, 0
    %p87 = por %p85, %p86
    %s88 = ssub.s32 %s12, %s19
    %p89 = scmp.eq.s32.totalorder %s88, 0
    %s91 = sadd.s32 %s90, 1
    %s92 = scalar_select %p89, %s90, %s91
    %p95 = pneg %p89
    %p96 = scmp.eq.s32.totalorder %s12, 1
    %p97 = por %p95, %p96
    %p98 = scmp.ne.s32.totalorder %s90, %s93
    %p99 = scmp.eq.s32.totalorder %s12, 0
    %p100 = por %p98, %p99
    %p101 = scmp.ne.s32.totalorder %s90, %s93
    %p102 = scmp.eq.s32.totalorder %s17, 1
    %p103 = por %p101, %p102
    %p104 = scmp.ne.s32.totalorder %s93, %s94
    %p105 = scmp.eq.s32.totalorder %s17, 0
    %p106 = por %p104, %p105
    %p107 = scmp.ne.s32.totalorder %s93, %s94
    %p108 = scmp.eq.s32.totalorder %s18, 1
    %p109 = por %p107, %p108
    %p111 = scmp.ne.s32.totalorder %s94, %s110
    %p112 = scmp.eq.s32.totalorder %s18, 0
    %p113 = por %p111, %p112
    %s115 = sadd.s32 %s114, 1
    %p118 = scmp.eq.s32.totalorder %s12, 1
    %p119 = scmp.ne.s32.totalorder %s114, %s116
    %p120 = scmp.eq.s32.totalorder %s12, 0
    %p121 = por %p119, %p120
    %p122 = scmp.ne.s32.totalorder %s114, %s116
    %p123 = scmp.eq.s32.totalorder %s17, 1
    %p124 = por %p122, %p123
    %p125 = scmp.ne.s32.totalorder %s116, %s117
    %p126 = scmp.eq.s32.totalorder %s17, 0
    %p127 = por %p125, %p126
    %p128 = scmp.ne.s32.totalorder %s116, %s117
    %p129 = scmp.eq.s32.totalorder %s18, 1
    %p130 = por %p128, %p129
    %p132 = scmp.ne.s32.totalorder %s117, %s131
    %p133 = scmp.eq.s32.totalorder %s18, 0
    %p134 = por %p132, %p133
    %s136 = sadd.s32 %s135, 1
    %p139 = scmp.eq.s32.totalorder %s12, 1
    %p140 = scmp.ne.s32.totalorder %s135, %s137
    %p141 = scmp.eq.s32.totalorder %s12, 0
    %p142 = por %p140, %p141
    %p143 = scmp.ne.s32.totalorder %s135, %s137
    %p144 = scmp.eq.s32.totalorder %s17, 1
    %p145 = por %p143, %p144
    %p146 = scmp.ne.s32.totalorder %s137, %s138
    %p147 = scmp.eq.s32.totalorder %s17, 0
    %p148 = por %p146, %p147
    %p149 = scmp.ne.s32.totalorder %s137, %s138
    %p150 = scmp.eq.s32.totalorder %s18, 1
    %p151 = por %p149, %p150
    %p153 = scmp.ne.s32.totalorder %s138, %s152
    %p154 = scmp.eq.s32.totalorder %s18, 0
    %p155 = por %p153, %p154
    %s157 = sadd.s32 %s156, 1
    %p160 = scmp.eq.s32.totalorder %s12, 1
    %p161 = scmp.ne.s32.totalorder %s156, %s158
    %p162 = scmp.eq.s32.totalorder %s12, 0
    %p163 = por %p161, %p162
    %p164 = scmp.ne.s32.totalorder %s156, %s158
    %p165 = scmp.eq.s32.totalorder %s17, 1
    %p166 = por %p164, %p165
    %p167 = scmp.ne.s32.totalorder %s158, %s159
    %p168 = scmp.eq.s32.totalorder %s17, 0
    %p169 = por %p167, %p168
    %p170 = scmp.ne.s32.totalorder %s158, %s159
    %p171 = scmp.eq.s32.totalorder %s18, 1
    %p172 = por %p170, %p171
    %p174 = scmp.ne.s32.totalorder %s159, %s173
    %p175 = scmp.eq.s32.totalorder %s18, 0
    %p176 = por %p174, %p175
    %p177 = scmp.le.s32.totalorder 1, %s12
    %p178 = scmp.lt.s32.totalorder %s12, 3
    %p179 = pnand %p177, %p178
    %p180 = pneg %p179
    // Predicated region
    $region9: #{gnn_forward.1} parent=5 // pred_check
      _
    $region10: #{gnn_forward.1} parent=5 // pred_check_branch
      %182 = sbr.rel (%p179) target = $region12
    $region11: #{gnn_forward.1} parent=5 // pred_region
      %s183 = ssub.s32 %s12, 1
      // Predicated region
      $region13: #{gnn_forward.1} parent=11 // pred_check
        %p184 = pneg %p33
      $region14: #{gnn_forward.1} parent=11 // pred_check_branch
        %186 = sbr.rel (%p184) target = $region16
      $region15: #{gnn_forward.1} parent=11 // pred_region
        _
      $region16: #{gnn_forward.1} parent=11 // pred_fallthru
        _
      // Predicated region
      $region17: #{gnn_forward.1} parent=11 // pred_check
        %p187 = pneg %p54
      $region18: #{gnn_forward.1} parent=11 // pred_check_branch
        %189 = sbr.rel (%p187) target = $region20
      $region19: #{gnn_forward.1} parent=11 // pred_region
        _
      $region20: #{gnn_forward.1} parent=11 // pred_fallthru
        _
      // Predicated region
      $region21: #{gnn_forward.1} parent=11 // pred_check
        %p190 = pneg %p127
      $region22: #{gnn_forward.1} parent=11 // pred_check_branch
        %192 = sbr.rel (%p190) target = $region24
      $region23: #{gnn_forward.1} parent=11 // pred_region
        _
      $region24: #{gnn_forward.1} parent=11 // pred_fallthru
        _
      // Predicated region
      $region25: #{gnn_forward.1} parent=11 // pred_check
        %p193 = pneg %p148
      $region26: #{gnn_forward.1} parent=11 // pred_check_branch
        %195 = sbr.rel (%p193) target = $region28
      $region27: #{gnn_forward.1} parent=11 // pred_region
        _
      $region28: #{gnn_forward.1} parent=11 // pred_fallthru
        _
    $region12: #{gnn_forward.1} parent=5 // pred_fallthru
      _
    %p196 = scmp.lt.s32.totalorder %s12, 2
    // Predicated region
    $region29: #{gnn_forward.1} parent=5 // pred_check
      %p197 = pneg %p196
    $region30: #{gnn_forward.1} parent=5 // pred_check_branch
      %199 = sbr.rel (%p197) target = $region32
    $region31: #{gnn_forward.1} parent=5 // pred_region
      // Predicated region
      $region33: #{gnn_forward.1} parent=31 // pred_check
        %p200 = pneg %p74
      $region34: #{gnn_forward.1} parent=31 // pred_check_branch
        %202 = sbr.rel (%p200) target = $region36
      $region35: #{gnn_forward.1} parent=31 // pred_region
        %p203 = scmp.lt.s32.totalorder %s12, 1
        %s204 = scalar_select %p203, %s12, 1
        %s205 = smul.addr %s204, 16
        %s206 = smul.addr %s205, 4
        %s207 = scalar_lea.vmem %s2, %s206
      $region36: #{gnn_forward.1} parent=31 // pred_fallthru
        _
      // Predicated region
      $region37: #{gnn_forward.1} parent=31 // pred_check
        %p208 = pneg %p100
      $region38: #{gnn_forward.1} parent=31 // pred_check_branch
        %210 = sbr.rel (%p208) target = $region40
      $region39: #{gnn_forward.1} parent=31 // pred_region
        %p211 = scmp.lt.s32.totalorder %s12, 1
        %s212 = scalar_select %p211, %s12, 1
        %s213 = smul.addr %s212, 8
        %s214 = scalar_lea.vmem %s3, %s213
      $region40: #{gnn_forward.1} parent=31 // pred_fallthru
        _
    $region32: #{gnn_forward.1} parent=5 // pred_fallthru
      _
    %p215 = scmp.le.s32.totalorder 1, %s12
    %p216 = scmp.lt.s32.totalorder %s12, 3
    %p217 = pnand %p215, %p216
    %p218 = pneg %p217
    // Predicated region
    $region41: #{gnn_forward.1} parent=5 // pred_check
      _
    $region42: #{gnn_forward.1} parent=5 // pred_check_branch
      %220 = sbr.rel (%p217) target = $region44
    $region43: #{gnn_forward.1} parent=5 // pred_region
      %s221 = ssub.s32 %s12, 1
      %p222 = pneg %p33
      %p223 = pneg %p30
      %p224 = pneg %p54
      %p225 = pneg %p51
      %p226 = scmp.lt.s32.totalorder %s17, 1
      %s227 = scalar_select %p226, %s17, 1
      %s228 = smul.addr %s227, 16
      %s229 = smul.addr %s228, 4
      %s230 = scalar_lea.vmem %s2, %s229
      %p231 = pneg %p80
      %p232 = pneg %p77
      %p233 = scmp.lt.s32.totalorder %s17, 1
      %s234 = scalar_select %p233, %s17, 1
      %s235 = smul.addr %s234, 8
      %s236 = scalar_lea.vmem %s3, %s235
      %p237 = pneg %p106
      %p238 = pneg %p103
      %p239 = pneg %p127
      %p240 = pneg %p124
      %p241 = pneg %p148
      %p242 = pneg %p145
      %p243 = pneg %p169
      %p244 = pneg %p166
      %p245 = scmp.lt.s32.totalorder %s17, 1
      %s246 = scalar_select %p245, %s17, 1
      %s247 = smul.addr %s246, 16
      %s248 = smul.addr %s247, 4
      %s249 = scalar_lea.vmem %s2, %s248
      %p250 = scmp.lt.s32.totalorder %s17, 1
      %s251 = scalar_select %p250, %s17, 1
      %s252 = smul.addr %s251, 8
      %s253 = scalar_lea.vmem %s3, %s252
      %p255 = scmp.eq.s32.totalorder %s17, 0
      // Predicated region
      $region45: #{gnn_forward.1} parent=43 // pred_check
        %p256 = pneg %p255
      $region46: #{gnn_forward.1} parent=43 // pred_check_branch
        %258 = sbr.rel (%p256) target = $region48
      $region47: #{gnn_forward.1} parent=43 // pred_region
        %v259 = vld [vmem:[%s0] sm:$0xff]
        %v260 = vld [vmem:[%s0 + $0x8] sm:$0xff]
        %v261 = vld [vmem:[%s0 + $0x10] sm:$0xff]
        %v262 = vld [vmem:[%s0 + $0x18] sm:$0xff]
        %v263 = vld [vmem:[%s0 + $0x20] sm:$0xff]
        %v264 = vld [vmem:[%s0 + $0x28] sm:$0xff]
        %v265 = vld [vmem:[%s0 + $0x30] sm:$0xff]
        %v266 = vld [vmem:[%s0 + $0x38] sm:$0xff]
        %v267 = vld [vmem:[%s0 + $0x40] sm:$0xff]
        %v268 = vld [vmem:[%s0 + $0x48] sm:$0xff]
        %v269 = vld [vmem:[%s0 + $0x50] sm:$0xff]
        %v270 = vld [vmem:[%s0 + $0x58] sm:$0xff]
        %v271 = vld [vmem:[%s0 + $0x60] sm:$0xff]
        %v272 = vld [vmem:[%s0 + $0x68] sm:$0xff]
        %v273 = vld [vmem:[%s0 + $0x70] sm:$0xff]
        %v274 = vld [vmem:[%s0 + $0x78] sm:$0xff]
        %275 = vst [vmem:[#allocation2] sm:$0xff] %v259
        %276 = vst [vmem:[#allocation2 + $0x8] sm:$0xff] %v260
        %277 = vst [vmem:[#allocation2 + $0x10] sm:$0xff] %v261
        %278 = vst [vmem:[#allocation2 + $0x18] sm:$0xff] %v262
        %279 = vst [vmem:[#allocation2 + $0x20] sm:$0xff] %v263
        %280 = vst [vmem:[#allocation2 + $0x28] sm:$0xff] %v264
        %281 = vst [vmem:[#allocation2 + $0x30] sm:$0xff] %v265
        %282 = vst [vmem:[#allocation2 + $0x38] sm:$0xff] %v266
        %283 = vst [vmem:[#allocation2 + $0x40] sm:$0xff] %v267
        %284 = vst [vmem:[#allocation2 + $0x48] sm:$0xff] %v268
        %285 = vst [vmem:[#allocation2 + $0x50] sm:$0xff] %v269
        %286 = vst [vmem:[#allocation2 + $0x58] sm:$0xff] %v270
        %287 = vst [vmem:[#allocation2 + $0x60] sm:$0xff] %v271
        %288 = vst [vmem:[#allocation2 + $0x68] sm:$0xff] %v272
        %289 = vst [vmem:[#allocation2 + $0x70] sm:$0xff] %v273
        %290 = vst [vmem:[#allocation2 + $0x78] sm:$0xff] %v274
      $region48: #{gnn_forward.1} parent=43 // pred_fallthru
        _
      %v291 = vld [vmem:[#allocation2] sm:$0xff]
      %v292 = vld [vmem:[#allocation2 + $0x8] sm:$0xff]
      %v293 = vld [vmem:[#allocation2 + $0x10] sm:$0xff]
      %v294 = vld [vmem:[#allocation2 + $0x18] sm:$0xff]
      %v295 = vld [vmem:[#allocation2 + $0x20] sm:$0xff]
      %v296 = vld [vmem:[#allocation2 + $0x28] sm:$0xff]
      %v297 = vld [vmem:[#allocation2 + $0x30] sm:$0xff]
      %v298 = vld [vmem:[#allocation2 + $0x38] sm:$0xff]
      %v299 = vld [vmem:[#allocation2 + $0x40] sm:$0xff]
      %v300 = vld [vmem:[#allocation2 + $0x48] sm:$0xff]
      %v301 = vld [vmem:[#allocation2 + $0x50] sm:$0xff]
      %v302 = vld [vmem:[#allocation2 + $0x58] sm:$0xff]
      %v303 = vld [vmem:[#allocation2 + $0x60] sm:$0xff]
      %v304 = vld [vmem:[#allocation2 + $0x68] sm:$0xff]
      %v305 = vld [vmem:[#allocation2 + $0x70] sm:$0xff]
      %v306 = vld [vmem:[#allocation2 + $0x78] sm:$0xff]
      %v307 = vpack.c.bf16 %v292, %v291
      %v308 = vpack.c.bf16 %v294, %v293
      %v309 = vpack.c.bf16 %v296, %v295
      %v310 = vpack.c.bf16 %v298, %v297
      %v311 = vpack.c.bf16 %v300, %v299
      %v312 = vpack.c.bf16 %v302, %v301
      %v313 = vpack.c.bf16 %v304, %v303
      %v314 = vpack.c.bf16 %v306, %v305
      %v315 = vld [vmem:[%s249] sm:$0xf]
      %v316 = vld [vmem:[%s249 + $0x4] sm:$0xf]
      %v317 = vld [vmem:[%s249 + $0x8] sm:$0xf]
      %v318 = vld [vmem:[%s249 + $0xc] sm:$0xf]
      %v319 = vld [vmem:[%s249 + $0x10] sm:$0xf]
      %v320 = vld [vmem:[%s249 + $0x14] sm:$0xf]
      %v321 = vld [vmem:[%s249 + $0x18] sm:$0xf]
      %v322 = vld [vmem:[%s249 + $0x1c] sm:$0xf]
      %v323 = vld [vmem:[%s249 + $0x20] sm:$0xf]
      %v324 = vld [vmem:[%s249 + $0x24] sm:$0xf]
      %v325 = vld [vmem:[%s249 + $0x28] sm:$0xf]
      %v326 = vld [vmem:[%s249 + $0x2c] sm:$0xf]
      %v327 = vld [vmem:[%s249 + $0x30] sm:$0xf]
      %v328 = vld [vmem:[%s249 + $0x34] sm:$0xf]
      %v329 = vld [vmem:[%s249 + $0x38] sm:$0xf]
      %v330 = vld [vmem:[%s249 + $0x3c] sm:$0xf]
      %v347 = vunpack.c.l.b16 %v315
      %v348 = vunpack.c.l.b16 %v316
      %v349 = vunpack.c.l.b16 %v317
      %v350 = vunpack.c.l.b16 %v318
      %v351 = vunpack.c.l.b16 %v319
      %v352 = vunpack.c.l.b16 %v320
      %v353 = vunpack.c.l.b16 %v321
      %v354 = vunpack.c.l.b16 %v322
      %v355 = vunpack.c.l.b16 %v323
      %v356 = vunpack.c.l.b16 %v324
      %v357 = vunpack.c.l.b16 %v325
      %v358 = vunpack.c.l.b16 %v326
      %v359 = vunpack.c.l.b16 %v327
      %v360 = vunpack.c.l.b16 %v328
      %v361 = vunpack.c.l.b16 %v329
      %v362 = vunpack.c.l.b16 %v330
      %v363 = vpack.c.b16 %v348, %v347
      %v364 = vpack.c.b16 %v350, %v349
      %v365 = vpack.c.b16 %v352, %v351
      %v366 = vpack.c.b16 %v354, %v353
      %v367 = vpack.c.b16 %v356, %v355
      %v368 = vpack.c.b16 %v358, %v357
      %v369 = vpack.c.b16 %v360, %v359
      %v370 = vpack.c.b16 %v362, %v361
      %379 = vmatprep.subr.bf16.mxu0 0
      %380 = vmatpush1.bf16.msra.mxu0 %v370
      %381 = vmatprep.subr.bf16.mxu0 0
      %382 = vmatpush1.bf16.msra.mxu0 %v369
      %383 = vmatprep.subr.bf16.mxu0 0
      %384 = vmatpush1.bf16.msra.mxu0 %v368
      %385 = vmatprep.subr.bf16.mxu0 0
      %386 = vmatpush1.bf16.msra.mxu0 %v367
      %387 = vmatprep.subr.bf16.mxu0 0
      %388 = vmatpush1.bf16.msra.mxu0 %v366
      %389 = vmatprep.subr.bf16.mxu0 0
      %390 = vmatpush1.bf16.msra.mxu0 %v365
      %391 = vmatprep.subr.bf16.mxu0 0
      %392 = vmatpush1.bf16.msra.mxu0 %v364
      %393 = vmatprep.subr.bf16.mxu0 0
      %394 = vmatpush1.bf16.msra.mxu0 %v363
      %395 = vmatprep.subr.bf16.mxu0 0
      %396 = vmatpush2.bf16.msra.mxu0 0
      %397 = vmatprep.subr.bf16.mxu0 0
      %398 = vmatpush2.bf16.msra.mxu0 0
      %399 = vmatprep.subr.bf16.mxu0 0
      %400 = vmatpush2.bf16.msra.mxu0 0
      %401 = vmatprep.subr.bf16.mxu0 0
      %402 = vmatpush2.bf16.msra.mxu0 0
      %403 = vmatprep.subr.bf16.mxu0 0
      %404 = vmatpush2.bf16.msra.mxu0 0
      %405 = vmatprep.subr.bf16.mxu0 0
      %406 = vmatpush2.bf16.msra.mxu0 0
      %407 = vmatprep.subr.bf16.mxu0 0
      %408 = vmatpush2.bf16.msra.mxu0 0
      %409 = vmatprep.subr.bf16.mxu0 0
      %410 = vmatpush2.bf16.msra.mxu0 0
      %411 = vmatprep.mubr.bf16.mxu0 0
      %412 = vmatmul.mubr.bf16.gmra.mxu0 %v307
      %v413 = vpop.f32.mrf.mxu0
      %v414 = vadd.f32 0.0, %v413
      %v415 = vpop.f32.mrf.mxu0
      %v416 = vpop.f32.mrf.mxu0
      %v417 = vadd.f32 0.0, %v416
      %v418 = vpop.f32.mrf.mxu0
      %419 = vmatprep.mubr.bf16.mxu0 0
      %420 = vmatmul.mubr.bf16.gmra.mxu0 %v308
      %v421 = vpop.f32.mrf.mxu0
      %v422 = vadd.f32 0.0, %v421
      %v423 = vpop.f32.mrf.mxu0
      %v424 = vpop.f32.mrf.mxu0
      %v425 = vadd.f32 0.0, %v424
      %v426 = vpop.f32.mrf.mxu0
      %427 = vmatprep.mubr.bf16.mxu0 0
      %428 = vmatmul.mubr.bf16.gmra.mxu0 %v309
      %v429 = vpop.f32.mrf.mxu0
      %v430 = vadd.f32 0.0, %v429
      %v431 = vpop.f32.mrf.mxu0
      %v432 = vpop.f32.mrf.mxu0
      %v433 = vadd.f32 0.0, %v432
      %v434 = vpop.f32.mrf.mxu0
      %435 = vmatprep.mubr.bf16.mxu0 0
      %436 = vmatmul.mubr.bf16.gmra.mxu0 %v310
      %v437 = vpop.f32.mrf.mxu0
      %v438 = vadd.f32 0.0, %v437
      %v439 = vpop.f32.mrf.mxu0
      %v440 = vpop.f32.mrf.mxu0
      %v441 = vadd.f32 0.0, %v440
      %v442 = vpop.f32.mrf.mxu0
      %443 = vmatprep.mubr.bf16.mxu0 0
      %444 = vmatmul.mubr.bf16.gmra.mxu0 %v311
      %v445 = vpop.f32.mrf.mxu0
      %v446 = vadd.f32 0.0, %v445
      %v447 = vpop.f32.mrf.mxu0
      %v448 = vpop.f32.mrf.mxu0
      %v449 = vadd.f32 0.0, %v448
      %v450 = vpop.f32.mrf.mxu0
      %451 = vmatprep.mubr.bf16.mxu0 0
      %452 = vmatmul.mubr.bf16.gmra.mxu0 %v312
      %v453 = vpop.f32.mrf.mxu0
      %v454 = vadd.f32 0.0, %v453
      %v455 = vpop.f32.mrf.mxu0
      %v456 = vpop.f32.mrf.mxu0
      %v457 = vadd.f32 0.0, %v456
      %v458 = vpop.f32.mrf.mxu0
      %459 = vmatprep.mubr.bf16.mxu0 0
      %460 = vmatmul.mubr.bf16.gmra.mxu0 %v313
      %v461 = vpop.f32.mrf.mxu0
      %v462 = vadd.f32 0.0, %v461
      %v463 = vpop.f32.mrf.mxu0
      %v464 = vpop.f32.mrf.mxu0
      %v465 = vadd.f32 0.0, %v464
      %v466 = vpop.f32.mrf.mxu0
      %467 = vmatprep.mubr.bf16.mxu0 0
      %468 = vmatmul.mubr.bf16.gmra.mxu0 %v314
      %v469 = vpop.f32.mrf.mxu0
      %v470 = vadd.f32 0.0, %v469
      %v471 = vpop.f32.mrf.mxu0
      %v472 = vpop.f32.mrf.mxu0
      %v473 = vadd.f32 0.0, %v472
      %v474 = vpop.f32.mrf.mxu0
      %475 = vdwg.mxu0
      %v476 = vld [vmem:[%s253] sm:$0xff]
      %v477 = vld [vmem:[%s1] sm:$0xf]
      %v478 = vld [vmem:[%s1 + $0x4] sm:$0xf]
      %v479 = vld [vmem:[%s1 + $0x8] sm:$0xf]
      %v480 = vld [vmem:[%s1 + $0xc] sm:$0xf]
      %v481 = vld [vmem:[%s1 + $0x10] sm:$0xf]
      %v482 = vld [vmem:[%s1 + $0x14] sm:$0xf]
      %v483 = vld [vmem:[%s1 + $0x18] sm:$0xf]
      %v484 = vld [vmem:[%s1 + $0x1c] sm:$0xf]
      %v485 = vld [vmem:[%s1 + $0x20] sm:$0xf]
      %v486 = vld [vmem:[%s1 + $0x24] sm:$0xf]
      %v487 = vld [vmem:[%s1 + $0x28] sm:$0xf]
      %v488 = vld [vmem:[%s1 + $0x2c] sm:$0xf]
      %v489 = vld [vmem:[%s1 + $0x30] sm:$0xf]
      %v490 = vld [vmem:[%s1 + $0x34] sm:$0xf]
      %v491 = vld [vmem:[%s1 + $0x38] sm:$0xf]
      %v492 = vld [vmem:[%s1 + $0x3c] sm:$0xf]
      %v493 = vpack.c.bf16 %v417, %v414
      %v494 = vpack.c.bf16 %v425, %v422
      %v495 = vpack.c.bf16 %v433, %v430
      %v496 = vpack.c.bf16 %v441, %v438
      %v497 = vpack.c.bf16 %v449, %v446
      %v498 = vpack.c.bf16 %v457, %v454
      %v499 = vpack.c.bf16 %v465, %v462
      %v500 = vpack.c.bf16 %v473, %v470
      %v501 = vlaneseq
      %v502 = vshrl.u32 %v501, 7
      %v503 = vsub.s32 0, %v502
      %v504 = vrot.slane %v476, %v503
      %v521 = vunpack.c.l.b16 %v477
      %v522 = vunpack.c.l.b16 %v478
      %v523 = vunpack.c.l.b16 %v479
      %v524 = vunpack.c.l.b16 %v480
      %v525 = vunpack.c.l.b16 %v481
      %v526 = vunpack.c.l.b16 %v482
      %v527 = vunpack.c.l.b16 %v483
      %v528 = vunpack.c.l.b16 %v484
      %v529 = vunpack.c.l.b16 %v485
      %v530 = vunpack.c.l.b16 %v486
      %v531 = vunpack.c.l.b16 %v487
      %v532 = vunpack.c.l.b16 %v488
      %v533 = vunpack.c.l.b16 %v489
      %v534 = vunpack.c.l.b16 %v490
      %v535 = vunpack.c.l.b16 %v491
      %v536 = vunpack.c.l.b16 %v492
      %v537 = vpack.c.b16 %v522, %v521
      %v538 = vpack.c.b16 %v524, %v523
      %v539 = vpack.c.b16 %v526, %v525
      %v540 = vpack.c.b16 %v528, %v527
      %v541 = vpack.c.b16 %v530, %v529
      %v542 = vpack.c.b16 %v532, %v531
      %v543 = vpack.c.b16 %v534, %v533
      %v544 = vpack.c.b16 %v536, %v535
      %553 = vmatprep.subr.bf16.mxu0 0
      %554 = vmatpush1.bf16.msra.mxu0 %v500
      %555 = vmatprep.subr.bf16.mxu0 0
      %556 = vmatpush1.bf16.msra.mxu0 %v499
      %557 = vmatprep.subr.bf16.mxu0 0
      %558 = vmatpush1.bf16.msra.mxu0 %v498
      %559 = vmatprep.subr.bf16.mxu0 0
      %560 = vmatpush1.bf16.msra.mxu0 %v497
      %561 = vmatprep.subr.bf16.mxu0 0
      %562 = vmatpush1.bf16.msra.mxu0 %v496
      %563 = vmatprep.subr.bf16.mxu0 0
      %564 = vmatpush1.bf16.msra.mxu0 %v495
      %565 = vmatprep.subr.bf16.mxu0 0
      %566 = vmatpush1.bf16.msra.mxu0 %v494
      %567 = vmatprep.subr.bf16.mxu0 0
      %568 = vmatpush1.bf16.msra.mxu0 %v493
      %569 = vmatprep.subr.bf16.mxu0 0
      %570 = vmatpush2.bf16.msra.mxu0 0
      %571 = vmatprep.subr.bf16.mxu0 0
      %572 = vmatpush2.bf16.msra.mxu0 0
      %573 = vmatprep.subr.bf16.mxu0 0
      %574 = vmatpush2.bf16.msra.mxu0 0
      %575 = vmatprep.subr.bf16.mxu0 0
      %576 = vmatpush2.bf16.msra.mxu0 0
      %577 = vmatprep.subr.bf16.mxu0 0
      %578 = vmatpush2.bf16.msra.mxu0 0
      %579 = vmatprep.subr.bf16.mxu0 0
      %580 = vmatpush2.bf16.msra.mxu0 0
      %581 = vmatprep.subr.bf16.mxu0 0
      %582 = vmatpush2.bf16.msra.mxu0 0
      %583 = vmatprep.subr.bf16.mxu0 0
      %584 = vmatpush2.bf16.msra.mxu0 0
      %585 = vmatprep.mubr.bf16.mxu0 0
      %586 = vmatmul.mubr.bf16.gmra.mxu0 %v537
      %v587 = vpop.f32.mrf.mxu0
      %v588 = vadd.f32 %v504, %v587
      %v589 = vpop.f32.mrf.mxu0
      %v590 = vpop.f32.mrf.mxu0
      %v591 = vadd.f32 %v504, %v590
      %v592 = vpop.f32.mrf.mxu0
      %593 = vmatprep.mubr.bf16.mxu0 0
      %594 = vmatmul.mubr.bf16.gmra.mxu0 %v538
      %v595 = vpop.f32.mrf.mxu0
      %v596 = vadd.f32 %v504, %v595
      %v597 = vpop.f32.mrf.mxu0
      %v598 = vpop.f32.mrf.mxu0
      %v599 = vadd.f32 %v504, %v598
      %v600 = vpop.f32.mrf.mxu0
      %601 = vmatprep.mubr.bf16.mxu0 0
      %602 = vmatmul.mubr.bf16.gmra.mxu0 %v539
      %v603 = vpop.f32.mrf.mxu0
      %v604 = vadd.f32 %v504, %v603
      %v605 = vpop.f32.mrf.mxu0
      %v606 = vpop.f32.mrf.mxu0
      %v607 = vadd.f32 %v504, %v606
      %v608 = vpop.f32.mrf.mxu0
      %609 = vmatprep.mubr.bf16.mxu0 0
      %610 = vmatmul.mubr.bf16.gmra.mxu0 %v540
      %v611 = vpop.f32.mrf.mxu0
      %v612 = vadd.f32 %v504, %v611
      %v613 = vpop.f32.mrf.mxu0
      %v614 = vpop.f32.mrf.mxu0
      %v615 = vadd.f32 %v504, %v614
      %v616 = vpop.f32.mrf.mxu0
      %617 = vmatprep.mubr.bf16.mxu0 0
      %618 = vmatmul.mubr.bf16.gmra.mxu0 %v541
      %v619 = vpop.f32.mrf.mxu0
      %v620 = vadd.f32 %v504, %v619
      %v621 = vpop.f32.mrf.mxu0
      %v622 = vpop.f32.mrf.mxu0
      %v623 = vadd.f32 %v504, %v622
      %v624 = vpop.f32.mrf.mxu0
      %625 = vmatprep.mubr.bf16.mxu0 0
      %626 = vmatmul.mubr.bf16.gmra.mxu0 %v542
      %v627 = vpop.f32.mrf.mxu0
      %v628 = vadd.f32 %v504, %v627
      %v629 = vpop.f32.mrf.mxu0
      %v630 = vpop.f32.mrf.mxu0
      %v631 = vadd.f32 %v504, %v630
      %v632 = vpop.f32.mrf.mxu0
      %633 = vmatprep.mubr.bf16.mxu0 0
      %634 = vmatmul.mubr.bf16.gmra.mxu0 %v543
      %v635 = vpop.f32.mrf.mxu0
      %v636 = vadd.f32 %v504, %v635
      %v637 = vpop.f32.mrf.mxu0
      %v638 = vpop.f32.mrf.mxu0
      %v639 = vadd.f32 %v504, %v638
      %v640 = vpop.f32.mrf.mxu0
      %641 = vmatprep.mubr.bf16.mxu0 0
      %642 = vmatmul.mubr.bf16.gmra.mxu0 %v544
      %v643 = vpop.f32.mrf.mxu0
      %v644 = vadd.f32 %v504, %v643
      %v645 = vpop.f32.mrf.mxu0
      %v646 = vpop.f32.mrf.mxu0
      %v647 = vadd.f32 %v504, %v646
      %v648 = vpop.f32.mrf.mxu0
      %649 = vdwg.mxu0
      %650 = vadd.xlane.f32.xlu0 %v588
      %v651 = vpop.xlane.xlu0 %650
      %652 = vadd.xlane.f32.xlu0 %v591
      %v653 = vpop.xlane.xlu0 %652
      %654 = vadd.xlane.f32.xlu0 %v596
      %v655 = vpop.xlane.xlu0 %654
      %656 = vadd.xlane.f32.xlu0 %v599
      %v657 = vpop.xlane.xlu0 %656
      %658 = vadd.xlane.f32.xlu0 %v604
      %v659 = vpop.xlane.xlu0 %658
      %660 = vadd.xlane.f32.xlu0 %v607
      %v661 = vpop.xlane.xlu0 %660
      %662 = vadd.xlane.f32.xlu0 %v612
      %v663 = vpop.xlane.xlu0 %662
      %664 = vadd.xlane.f32.xlu0 %v615
      %v665 = vpop.xlane.xlu0 %664
      %666 = vadd.xlane.f32.xlu0 %v620
      %v667 = vpop.xlane.xlu0 %666
      %668 = vadd.xlane.f32.xlu0 %v623
      %v669 = vpop.xlane.xlu0 %668
      %670 = vadd.xlane.f32.xlu0 %v628
      %v671 = vpop.xlane.xlu0 %670
      %672 = vadd.xlane.f32.xlu0 %v631
      %v673 = vpop.xlane.xlu0 %672
      %674 = vadd.xlane.f32.xlu0 %v636
      %v675 = vpop.xlane.xlu0 %674
      %676 = vadd.xlane.f32.xlu0 %v639
      %v677 = vpop.xlane.xlu0 %676
      %678 = vadd.xlane.f32.xlu0 %v644
      %v679 = vpop.xlane.xlu0 %678
      %680 = vadd.xlane.f32.xlu0 %v647
      %v681 = vpop.xlane.xlu0 %680
      %v682 = vmul.f32 %v651, 0.03125
      %v683 = vmul.f32 %v653, 0.03125
      %v684 = vmul.f32 %v655, 0.03125
      %v685 = vmul.f32 %v657, 0.03125
      %v686 = vmul.f32 %v659, 0.03125
      %v687 = vmul.f32 %v661, 0.03125
      %v688 = vmul.f32 %v663, 0.03125
      %v689 = vmul.f32 %v665, 0.03125
      %v690 = vmul.f32 %v667, 0.03125
      %v691 = vmul.f32 %v669, 0.03125
      %v692 = vmul.f32 %v671, 0.03125
      %v693 = vmul.f32 %v673, 0.03125
      %v694 = vmul.f32 %v675, 0.03125
      %v695 = vmul.f32 %v677, 0.03125
      %v696 = vmul.f32 %v679, 0.03125
      %v697 = vmul.f32 %v681, 0.03125
      %v698 = vmul.f32 %v588, %v588
      %v699 = vmul.f32 %v591, %v591
      %v700 = vmul.f32 %v596, %v596
      %v701 = vmul.f32 %v599, %v599
      %v702 = vmul.f32 %v604, %v604
      %v703 = vmul.f32 %v607, %v607
      %v704 = vmul.f32 %v612, %v612
      %v705 = vmul.f32 %v615, %v615
      %v706 = vmul.f32 %v620, %v620
      %v707 = vmul.f32 %v623, %v623
      %v708 = vmul.f32 %v628, %v628
      %v709 = vmul.f32 %v631, %v631
      %v710 = vmul.f32 %v636, %v636
      %v711 = vmul.f32 %v639, %v639
      %v712 = vmul.f32 %v644, %v644
      %v713 = vmul.f32 %v647, %v647
      %714 = vadd.xlane.f32.xlu0 %v698
      %v715 = vpop.xlane.xlu0 %714
      %716 = vadd.xlane.f32.xlu0 %v699
      %v717 = vpop.xlane.xlu0 %716
      %718 = vadd.xlane.f32.xlu0 %v700
      %v719 = vpop.xlane.xlu0 %718
      %720 = vadd.xlane.f32.xlu0 %v701
      %v721 = vpop.xlane.xlu0 %720
      %722 = vadd.xlane.f32.xlu0 %v702
      %v723 = vpop.xlane.xlu0 %722
      %724 = vadd.xlane.f32.xlu0 %v703
      %v725 = vpop.xlane.xlu0 %724
      %726 = vadd.xlane.f32.xlu0 %v704
      %v727 = vpop.xlane.xlu0 %726
      %728 = vadd.xlane.f32.xlu0 %v705
      %v729 = vpop.xlane.xlu0 %728
      %730 = vadd.xlane.f32.xlu0 %v706
      %v731 = vpop.xlane.xlu0 %730
      %732 = vadd.xlane.f32.xlu0 %v707
      %v733 = vpop.xlane.xlu0 %732
      %734 = vadd.xlane.f32.xlu0 %v708
      %v735 = vpop.xlane.xlu0 %734
      %736 = vadd.xlane.f32.xlu0 %v709
      %v737 = vpop.xlane.xlu0 %736
      %738 = vadd.xlane.f32.xlu0 %v710
      %v739 = vpop.xlane.xlu0 %738
      %740 = vadd.xlane.f32.xlu0 %v711
      %v741 = vpop.xlane.xlu0 %740
      %742 = vadd.xlane.f32.xlu0 %v712
      %v743 = vpop.xlane.xlu0 %742
      %744 = vadd.xlane.f32.xlu0 %v713
      %v745 = vpop.xlane.xlu0 %744
      %v746 = vmul.f32 %v715, 0.03125
      %v747 = vmul.f32 %v717, 0.03125
      %v748 = vmul.f32 %v719, 0.03125
      %v749 = vmul.f32 %v721, 0.03125
      %v750 = vmul.f32 %v723, 0.03125
      %v751 = vmul.f32 %v725, 0.03125
      %v752 = vmul.f32 %v727, 0.03125
      %v753 = vmul.f32 %v729, 0.03125
      %v754 = vmul.f32 %v731, 0.03125
      %v755 = vmul.f32 %v733, 0.03125
      %v756 = vmul.f32 %v735, 0.03125
      %v757 = vmul.f32 %v737, 0.03125
      %v758 = vmul.f32 %v739, 0.03125
      %v759 = vmul.f32 %v741, 0.03125
      %v760 = vmul.f32 %v743, 0.03125
      %v761 = vmul.f32 %v745, 0.03125
      %v762 = vmul.f32 %v682, %v682
      %v763 = vmul.f32 %v683, %v683
      %v764 = vmul.f32 %v684, %v684
      %v765 = vmul.f32 %v685, %v685
      %v766 = vmul.f32 %v686, %v686
      %v767 = vmul.f32 %v687, %v687
      %v768 = vmul.f32 %v688, %v688
      %v769 = vmul.f32 %v689, %v689
      %v770 = vmul.f32 %v690, %v690
      %v771 = vmul.f32 %v691, %v691
      %v772 = vmul.f32 %v692, %v692
      %v773 = vmul.f32 %v693, %v693
      %v774 = vmul.f32 %v694, %v694
      %v775 = vmul.f32 %v695, %v695
      %v776 = vmul.f32 %v696, %v696
      %v777 = vmul.f32 %v697, %v697
      %v778 = vsub.f32 %v746, %v762
      %v779 = vsub.f32 %v747, %v763
      %v780 = vsub.f32 %v748, %v764
      %v781 = vsub.f32 %v749, %v765
      %v782 = vsub.f32 %v750, %v766
      %v783 = vsub.f32 %v751, %v767
      %v784 = vsub.f32 %v752, %v768
      %v785 = vsub.f32 %v753, %v769
      %v786 = vsub.f32 %v754, %v770
      %v787 = vsub.f32 %v755, %v771
      %v788 = vsub.f32 %v756, %v772
      %v789 = vsub.f32 %v757, %v773
      %v790 = vsub.f32 %v758, %v774
      %v791 = vsub.f32 %v759, %v775
      %v792 = vsub.f32 %v760, %v776
      %v793 = vsub.f32 %v761, %v777
      %v794 = vmax.f32 %v778, 0.0
      %v795 = vmax.f32 %v779, 0.0
      %v796 = vmax.f32 %v780, 0.0
      %v797 = vmax.f32 %v781, 0.0
      %v798 = vmax.f32 %v782, 0.0
      %v799 = vmax.f32 %v783, 0.0
      %v800 = vmax.f32 %v784, 0.0
      %v801 = vmax.f32 %v785, 0.0
      %v802 = vmax.f32 %v786, 0.0
      %v803 = vmax.f32 %v787, 0.0
      %v804 = vmax.f32 %v788, 0.0
      %v805 = vmax.f32 %v789, 0.0
      %v806 = vmax.f32 %v790, 0.0
      %v807 = vmax.f32 %v791, 0.0
      %v808 = vmax.f32 %v792, 0.0
      %v809 = vmax.f32 %v793, 0.0
      %v810 = vsub.f32 %v588, %v682
      %v811 = vsub.f32 %v591, %v683
      %v812 = vsub.f32 %v596, %v684
      %v813 = vsub.f32 %v599, %v685
      %v814 = vsub.f32 %v604, %v686
      %v815 = vsub.f32 %v607, %v687
      %v816 = vsub.f32 %v612, %v688
      %v817 = vsub.f32 %v615, %v689
      %v818 = vsub.f32 %v620, %v690
      %v819 = vsub.f32 %v623, %v691
      %v820 = vsub.f32 %v628, %v692
      %v821 = vsub.f32 %v631, %v693
      %v822 = vsub.f32 %v636, %v694
      %v823 = vsub.f32 %v639, %v695
      %v824 = vsub.f32 %v644, %v696
      %v825 = vsub.f32 %v647, %v697
      %v826 = vadd.f32 %v794, 1e-05
      %v827 = vadd.f32 %v795, 1e-05
      %v828 = vadd.f32 %v796, 1e-05
      %v829 = vadd.f32 %v797, 1e-05
      %v830 = vadd.f32 %v798, 1e-05
      %v831 = vadd.f32 %v799, 1e-05
      %v832 = vadd.f32 %v800, 1e-05
      %v833 = vadd.f32 %v801, 1e-05
      %v834 = vadd.f32 %v802, 1e-05
      %v835 = vadd.f32 %v803, 1e-05
      %v836 = vadd.f32 %v804, 1e-05
      %v837 = vadd.f32 %v805, 1e-05
      %v838 = vadd.f32 %v806, 1e-05
      %v839 = vadd.f32 %v807, 1e-05
      %v840 = vadd.f32 %v808, 1e-05
      %v841 = vadd.f32 %v809, 1e-05
      %v842 = vrsqrt.pop %v826
      %v843 = vrsqrt.pop %v827
      %v844 = vrsqrt.pop %v828
      %v845 = vrsqrt.pop %v829
      %v846 = vrsqrt.pop %v830
      %v847 = vrsqrt.pop %v831
      %v848 = vrsqrt.pop %v832
      %v849 = vrsqrt.pop %v833
      %v850 = vrsqrt.pop %v834
      %v851 = vrsqrt.pop %v835
      %v852 = vrsqrt.pop %v836
      %v853 = vrsqrt.pop %v837
      %v854 = vrsqrt.pop %v838
      %v855 = vrsqrt.pop %v839
      %v856 = vrsqrt.pop %v840
      %v857 = vrsqrt.pop %v841
      %v858 = vmul.f32 %v810, %v842
      %v859 = vmul.f32 %v811, %v843
      %v860 = vmul.f32 %v812, %v844
      %v861 = vmul.f32 %v813, %v845
      %v862 = vmul.f32 %v814, %v846
      %v863 = vmul.f32 %v815, %v847
      %v864 = vmul.f32 %v816, %v848
      %v865 = vmul.f32 %v817, %v849
      %v866 = vmul.f32 %v818, %v850
      %v867 = vmul.f32 %v819, %v851
      %v868 = vmul.f32 %v820, %v852
      %v869 = vmul.f32 %v821, %v853
      %v870 = vmul.f32 %v822, %v854
      %v871 = vmul.f32 %v823, %v855
      %v872 = vmul.f32 %v824, %v856
      %v873 = vmul.f32 %v825, %v857
      %v874 = vlaneseq
      %v875 = vshrl.u32 %v874, 7
      %v876 = vsub.s32 1, %v875
      %v877 = vrot.slane %v476, %v876
      %v878 = vmul.f32 %v858, %v877
      %v879 = vmul.f32 %v859, %v877
      %v880 = vmul.f32 %v860, %v877
      %v881 = vmul.f32 %v861, %v877
      %v882 = vmul.f32 %v862, %v877
      %v883 = vmul.f32 %v863, %v877
      %v884 = vmul.f32 %v864, %v877
      %v885 = vmul.f32 %v865, %v877
      %v886 = vmul.f32 %v866, %v877
      %v887 = vmul.f32 %v867, %v877
      %v888 = vmul.f32 %v868, %v877
      %v889 = vmul.f32 %v869, %v877
      %v890 = vmul.f32 %v870, %v877
      %v891 = vmul.f32 %v871, %v877
      %v892 = vmul.f32 %v872, %v877
      %v893 = vmul.f32 %v873, %v877
      %v894 = vlaneseq
      %v895 = vshrl.u32 %v894, 7
      %v896 = vsub.s32 2, %v895
      %v897 = vrot.slane %v476, %v896
      %v898 = vadd.f32 %v878, %v897
      %v899 = vadd.f32 %v879, %v897
      %v900 = vadd.f32 %v880, %v897
      %v901 = vadd.f32 %v881, %v897
      %v902 = vadd.f32 %v882, %v897
      %v903 = vadd.f32 %v883, %v897
      %v904 = vadd.f32 %v884, %v897
      %v905 = vadd.f32 %v885, %v897
      %v906 = vadd.f32 %v886, %v897
      %v907 = vadd.f32 %v887, %v897
      %v908 = vadd.f32 %v888, %v897
      %v909 = vadd.f32 %v889, %v897
      %v910 = vadd.f32 %v890, %v897
      %v911 = vadd.f32 %v891, %v897
      %v912 = vadd.f32 %v892, %v897
      %v913 = vadd.f32 %v893, %v897
      %v914 = vmax.f32 %v898, 0.0
      %v915 = vmax.f32 %v899, 0.0
      %v916 = vmax.f32 %v900, 0.0
      %v917 = vmax.f32 %v901, 0.0
      %v918 = vmax.f32 %v902, 0.0
      %v919 = vmax.f32 %v903, 0.0
      %v920 = vmax.f32 %v904, 0.0
      %v921 = vmax.f32 %v905, 0.0
      %v922 = vmax.f32 %v906, 0.0
      %v923 = vmax.f32 %v907, 0.0
      %v924 = vmax.f32 %v908, 0.0
      %v925 = vmax.f32 %v909, 0.0
      %v926 = vmax.f32 %v910, 0.0
      %v927 = vmax.f32 %v911, 0.0
      %v928 = vmax.f32 %v912, 0.0
      %v929 = vmax.f32 %v913, 0.0
      %v930 = vadd.f32 %v914, %v291
      %v931 = vadd.f32 %v915, %v292
      %v932 = vadd.f32 %v916, %v293
      %v933 = vadd.f32 %v917, %v294
      %v934 = vadd.f32 %v918, %v295
      %v935 = vadd.f32 %v919, %v296
      %v936 = vadd.f32 %v920, %v297
      %v937 = vadd.f32 %v921, %v298
      %v938 = vadd.f32 %v922, %v299
      %v939 = vadd.f32 %v923, %v300
      %v940 = vadd.f32 %v924, %v301
      %v941 = vadd.f32 %v925, %v302
      %v942 = vadd.f32 %v926, %v303
      %v943 = vadd.f32 %v927, %v304
      %v944 = vadd.f32 %v928, %v305
      %v945 = vadd.f32 %v929, %v306
      %946 = vst [vmem:[#allocation2] sm:$0xff] %v930
      %947 = vst [vmem:[#allocation2 + $0x8] sm:$0xff] %v931
      %948 = vst [vmem:[#allocation2 + $0x10] sm:$0xff] %v932
      %949 = vst [vmem:[#allocation2 + $0x18] sm:$0xff] %v933
      %950 = vst [vmem:[#allocation2 + $0x20] sm:$0xff] %v934
      %951 = vst [vmem:[#allocation2 + $0x28] sm:$0xff] %v935
      %952 = vst [vmem:[#allocation2 + $0x30] sm:$0xff] %v936
      %953 = vst [vmem:[#allocation2 + $0x38] sm:$0xff] %v937
      %954 = vst [vmem:[#allocation2 + $0x40] sm:$0xff] %v938
      %955 = vst [vmem:[#allocation2 + $0x48] sm:$0xff] %v939
      %956 = vst [vmem:[#allocation2 + $0x50] sm:$0xff] %v940
      %957 = vst [vmem:[#allocation2 + $0x58] sm:$0xff] %v941
      %958 = vst [vmem:[#allocation2 + $0x60] sm:$0xff] %v942
      %959 = vst [vmem:[#allocation2 + $0x68] sm:$0xff] %v943
      %960 = vst [vmem:[#allocation2 + $0x70] sm:$0xff] %v944
      %961 = vst [vmem:[#allocation2 + $0x78] sm:$0xff] %v945
      %p962 = scmp.eq.s32.totalorder %s17, 1
      // Predicated region
      $region49: #{gnn_forward.1} parent=43 // pred_check
        %p963 = pneg %p962
      $region50: #{gnn_forward.1} parent=43 // pred_check_branch
        %965 = sbr.rel (%p963) target = $region52
      $region51: #{gnn_forward.1} parent=43 // pred_region
        %v966 = vpack.c.bf16 %v931, %v930
        %v967 = vpack.c.bf16 %v933, %v932
        %v968 = vpack.c.bf16 %v935, %v934
        %v969 = vpack.c.bf16 %v937, %v936
        %v970 = vpack.c.bf16 %v939, %v938
        %v971 = vpack.c.bf16 %v941, %v940
        %v972 = vpack.c.bf16 %v943, %v942
        %v973 = vpack.c.bf16 %v945, %v944
        %v974 = vld [vmem:[%s4] sm:$0xf]
        %v975 = vld [vmem:[%s4 + $0x4] sm:$0xf]
        %v976 = vld [vmem:[%s4 + $0x8] sm:$0xf]
        %v977 = vld [vmem:[%s4 + $0xc] sm:$0xf]
        %v978 = vld [vmem:[%s4 + $0x10] sm:$0xf]
        %v979 = vld [vmem:[%s4 + $0x14] sm:$0xf]
        %v980 = vld [vmem:[%s4 + $0x18] sm:$0xf]
        %v981 = vld [vmem:[%s4 + $0x1c] sm:$0xf]
        %v982 = vld [vmem:[%s4 + $0x20] sm:$0xf]
        %v983 = vld [vmem:[%s4 + $0x24] sm:$0xf]
        %v984 = vld [vmem:[%s4 + $0x28] sm:$0xf]
        %v985 = vld [vmem:[%s4 + $0x2c] sm:$0xf]
        %v986 = vld [vmem:[%s4 + $0x30] sm:$0xf]
        %v987 = vld [vmem:[%s4 + $0x34] sm:$0xf]
        %v988 = vld [vmem:[%s4 + $0x38] sm:$0xf]
        %v989 = vld [vmem:[%s4 + $0x3c] sm:$0xf]
        %v990 = vld [vmem:[%s5] sm:$0x1]
        %v991 = vlaneseq
        %v992 = vshrl.u32 %v991, 7
        %v993 = vsub.s32 0, %v992
        %v994 = vrot.slane %v990, %v993
        %v1011 = vunpack.c.l.b16 %v974
        %v1012 = vunpack.c.l.b16 %v975
        %v1013 = vunpack.c.l.b16 %v976
        %v1014 = vunpack.c.l.b16 %v977
        %v1015 = vunpack.c.l.b16 %v978
        %v1016 = vunpack.c.l.b16 %v979
        %v1017 = vunpack.c.l.b16 %v980
        %v1018 = vunpack.c.l.b16 %v981
        %v1019 = vunpack.c.l.b16 %v982
        %v1020 = vunpack.c.l.b16 %v983
        %v1021 = vunpack.c.l.b16 %v984
        %v1022 = vunpack.c.l.b16 %v985
        %v1023 = vunpack.c.l.b16 %v986
        %v1024 = vunpack.c.l.b16 %v987
        %v1025 = vunpack.c.l.b16 %v988
        %v1026 = vunpack.c.l.b16 %v989
        %v1027 = vpack.c.b16 %v1012, %v1011
        %v1028 = vpack.c.b16 %v1014, %v1013
        %v1029 = vpack.c.b16 %v1016, %v1015
        %v1030 = vpack.c.b16 %v1018, %v1017
        %v1031 = vpack.c.b16 %v1020, %v1019
        %v1032 = vpack.c.b16 %v1022, %v1021
        %v1033 = vpack.c.b16 %v1024, %v1023
        %v1034 = vpack.c.b16 %v1026, %v1025
        %1043 = vmatprep.subr.bf16.mxu0 0
        %1044 = vmatpush1.bf16.msra.mxu0 %v1034
        %1045 = vmatprep.subr.bf16.mxu0 0
        %1046 = vmatpush1.bf16.msra.mxu0 %v1033
        %1047 = vmatprep.subr.bf16.mxu0 0
        %1048 = vmatpush1.bf16.msra.mxu0 %v1032
        %1049 = vmatprep.subr.bf16.mxu0 0
        %1050 = vmatpush1.bf16.msra.mxu0 %v1031
        %1051 = vmatprep.subr.bf16.mxu0 0
        %1052 = vmatpush1.bf16.msra.mxu0 %v1030
        %1053 = vmatprep.subr.bf16.mxu0 0
        %1054 = vmatpush1.bf16.msra.mxu0 %v1029
        %1055 = vmatprep.subr.bf16.mxu0 0
        %1056 = vmatpush1.bf16.msra.mxu0 %v1028
        %1057 = vmatprep.subr.bf16.mxu0 0
        %1058 = vmatpush1.bf16.msra.mxu0 %v1027
        %1059 = vmatprep.subr.bf16.mxu0 0
        %1060 = vmatpush2.bf16.msra.mxu0 0
        %1061 = vmatprep.subr.bf16.mxu0 0
        %1062 = vmatpush2.bf16.msra.mxu0 0
        %1063 = vmatprep.subr.bf16.mxu0 0
        %1064 = vmatpush2.bf16.msra.mxu0 0
        %1065 = vmatprep.subr.bf16.mxu0 0
        %1066 = vmatpush2.bf16.msra.mxu0 0
        %1067 = vmatprep.subr.bf16.mxu0 0
        %1068 = vmatpush2.bf16.msra.mxu0 0
        %1069 = vmatprep.subr.bf16.mxu0 0
        %1070 = vmatpush2.bf16.msra.mxu0 0
        %1071 = vmatprep.subr.bf16.mxu0 0
        %1072 = vmatpush2.bf16.msra.mxu0 0
        %1073 = vmatprep.subr.bf16.mxu0 0
        %1074 = vmatpush2.bf16.msra.mxu0 0
        %1075 = vmatprep.mubr.bf16.mxu0 0
        %1076 = vmatmul.mubr.bf16.gmra.mxu0 %v966
        %v1077 = vpop.f32.mrf.mxu0
        %v1078 = vadd.f32 %v994, %v1077
        %v1079 = vpop.f32.mrf.mxu0
        %v1080 = vpop.f32.mrf.mxu0
        %v1081 = vadd.f32 %v994, %v1080
        %v1082 = vpop.f32.mrf.mxu0
        %1083 = vmatprep.mubr.bf16.mxu0 0
        %1084 = vmatmul.mubr.bf16.gmra.mxu0 %v967
        %v1085 = vpop.f32.mrf.mxu0
        %v1086 = vadd.f32 %v994, %v1085
        %v1087 = vpop.f32.mrf.mxu0
        %v1088 = vpop.f32.mrf.mxu0
        %v1089 = vadd.f32 %v994, %v1088
        %v1090 = vpop.f32.mrf.mxu0
        %1091 = vmatprep.mubr.bf16.mxu0 0
        %1092 = vmatmul.mubr.bf16.gmra.mxu0 %v968
        %v1093 = vpop.f32.mrf.mxu0
        %v1094 = vadd.f32 %v994, %v1093
        %v1095 = vpop.f32.mrf.mxu0
        %v1096 = vpop.f32.mrf.mxu0
        %v1097 = vadd.f32 %v994, %v1096
        %v1098 = vpop.f32.mrf.mxu0
        %1099 = vmatprep.mubr.bf16.mxu0 0
        %1100 = vmatmul.mubr.bf16.gmra.mxu0 %v969
        %v1101 = vpop.f32.mrf.mxu0
        %v1102 = vadd.f32 %v994, %v1101
        %v1103 = vpop.f32.mrf.mxu0
        %v1104 = vpop.f32.mrf.mxu0
        %v1105 = vadd.f32 %v994, %v1104
        %v1106 = vpop.f32.mrf.mxu0
        %1107 = vmatprep.mubr.bf16.mxu0 0
        %1108 = vmatmul.mubr.bf16.gmra.mxu0 %v970
        %v1109 = vpop.f32.mrf.mxu0
        %v1110 = vadd.f32 %v994, %v1109
        %v1111 = vpop.f32.mrf.mxu0
        %v1112 = vpop.f32.mrf.mxu0
        %v1113 = vadd.f32 %v994, %v1112
        %v1114 = vpop.f32.mrf.mxu0
        %1115 = vmatprep.mubr.bf16.mxu0 0
        %1116 = vmatmul.mubr.bf16.gmra.mxu0 %v971
        %v1117 = vpop.f32.mrf.mxu0
        %v1118 = vadd.f32 %v994, %v1117
        %v1119 = vpop.f32.mrf.mxu0
        %v1120 = vpop.f32.mrf.mxu0
        %v1121 = vadd.f32 %v994, %v1120
        %v1122 = vpop.f32.mrf.mxu0
        %1123 = vmatprep.mubr.bf16.mxu0 0
        %1124 = vmatmul.mubr.bf16.gmra.mxu0 %v972
        %v1125 = vpop.f32.mrf.mxu0
        %v1126 = vadd.f32 %v994, %v1125
        %v1127 = vpop.f32.mrf.mxu0
        %v1128 = vpop.f32.mrf.mxu0
        %v1129 = vadd.f32 %v994, %v1128
        %v1130 = vpop.f32.mrf.mxu0
        %1131 = vmatprep.mubr.bf16.mxu0 0
        %1132 = vmatmul.mubr.bf16.gmra.mxu0 %v973
        %v1133 = vpop.f32.mrf.mxu0
        %v1134 = vadd.f32 %v994, %v1133
        %v1135 = vpop.f32.mrf.mxu0
        %v1136 = vpop.f32.mrf.mxu0
        %v1137 = vadd.f32 %v994, %v1136
        %v1138 = vpop.f32.mrf.mxu0
        %1139 = vdwg.mxu0
        %1140 = vst [vmem:[%s6] sm:$0xff] %v1078
        %1141 = vst [vmem:[%s6 + $0x8] sm:$0xff] %v1081
        %1142 = vst [vmem:[%s6 + $0x10] sm:$0xff] %v1086
        %1143 = vst [vmem:[%s6 + $0x18] sm:$0xff] %v1089
        %1144 = vst [vmem:[%s6 + $0x20] sm:$0xff] %v1094
        %1145 = vst [vmem:[%s6 + $0x28] sm:$0xff] %v1097
        %1146 = vst [vmem:[%s6 + $0x30] sm:$0xff] %v1102
        %1147 = vst [vmem:[%s6 + $0x38] sm:$0xff] %v1105
        %1148 = vst [vmem:[%s6 + $0x40] sm:$0xff] %v1110
        %1149 = vst [vmem:[%s6 + $0x48] sm:$0xff] %v1113
        %1150 = vst [vmem:[%s6 + $0x50] sm:$0xff] %v1118
        %1151 = vst [vmem:[%s6 + $0x58] sm:$0xff] %v1121
        %1152 = vst [vmem:[%s6 + $0x60] sm:$0xff] %v1126
        %1153 = vst [vmem:[%s6 + $0x68] sm:$0xff] %v1129
        %1154 = vst [vmem:[%s6 + $0x70] sm:$0xff] %v1134
        %1155 = vst [vmem:[%s6 + $0x78] sm:$0xff] %v1137
      $region52: #{gnn_forward.1} parent=43 // pred_fallthru
        _
      // Predicated region
      $region53: #{gnn_forward.1} parent=43 // pred_check
        %p1156 = pneg %p166
      $region54: #{gnn_forward.1} parent=43 // pred_check_branch
        %1158 = sbr.rel (%p1156) target = $region56
      $region55: #{gnn_forward.1} parent=43 // pred_region
        _
      $region56: #{gnn_forward.1} parent=43 // pred_fallthru
        _
      // Predicated region
      $region57: #{gnn_forward.1} parent=43 // pred_check
        %p1159 = pneg %p166
      $region58: #{gnn_forward.1} parent=43 // pred_check_branch
        %1161 = sbr.rel (%p1159) target = $region60
      $region59: #{gnn_forward.1} parent=43 // pred_region
        _
      $region60: #{gnn_forward.1} parent=43 // pred_fallthru
        _
    $region44: #{gnn_forward.1} parent=5 // pred_fallthru
      _
    %p1162 = scmp.le.s32.totalorder 2, %s12
    // Predicated region
    $region61: #{gnn_forward.1} parent=5 // pred_check
      %p1163 = pneg %p1162
    $region62: #{gnn_forward.1} parent=5 // pred_check_branch
      %1165 = sbr.rel (%p1163) target = $region64
    $region63: #{gnn_forward.1} parent=5 // pred_region
      %s1166 = ssub.s32 %s12, 2
    $region64: #{gnn_forward.1} parent=5 // pred_fallthru
      _
  $region6: #{gnn_forward.1} parent=0 // loop_footer
    %s16 = sadd.s32 1, %s12
  $region7: #{gnn_forward.1} parent=0 // loop_footer_branch
    %11 = sbr.rel target = $region3
  $region8: #{gnn_forward.1} parent=0 // loop_exit
    _

</llo_original>
